<compile_context>
chip_gen: v7x
topology: tpu7x:2x2x1
jax: 0.10.0
libtpu: 0.0.40
codegen_flags: <defaults>
</compile_context>

<pallas_src>
import functools
import math

import jax
import jax.numpy as jnp
from jax.experimental import pallas as pl
from jax.experimental.pallas import tpu as pltpu


# ---------------- hardware / tiling planning ----------------
def _round_up(x, m):
    return (x + m - 1) // m * m


@functools.lru_cache(maxsize=None)
def _vmem_budget_bytes():
    """Usable VMEM budget: ~3/4 of physical capacity, leaving headroom for
    Mosaic internal scratch/semaphores (important on v7x's 64 MiB)."""
    cap = 64 << 20                       # conservative default (v7x per-TC VMEM)
    try:
        cap = int(pltpu.get_tpu_info().vmem_capacity_bytes)
    except Exception:
        pass
    cap = max(32 << 20, min(cap, 128 << 20))
    return min(cap * 3 // 4, cap - (8 << 20))


def _pick_tile(dim, target, base=128):
    """Largest 128-aligned tile <= target; pad dim up to a multiple of it."""
    dim_pad = _round_up(dim, base)
    if dim_pad <= target:
        return dim_pad, dim_pad
    tile = max(base, (target // base) * base)
    return tile, _round_up(dim, tile)


def _plan_n(num_nodes):
    """Node-dim tiling shared by prepare_supports() and graph_convolution()."""
    budget = _vmem_budget_bytes()
    n_target = 1024 if budget >= (80 << 20) else 512   # big tiles on v5e/v6e
    tm, n_pad = _pick_tile(num_nodes, n_target)
    return tm, n_pad, budget


def prepare_supports(supports):
    """Cast the (S, N, N) adjacency stack to bf16 and zero-pad N to the kernel
    tile.  The adjacency is constant across layers / training steps: call this
    once and reuse it, instead of paying a cast+pad HBM pass per forward."""
    s, n, n2 = supports.shape
    assert n == n2, "supports must be (S, N, N)"
    _, n_pad, _ = _plan_n(n)
    a = supports.astype(jnp.bfloat16)
    if n_pad != n:
        a = jnp.pad(a, ((0, 0), (0, n_pad - n), (0, n_pad - n)))
    return a


# ---------------- Kernel 1: pre_sup[s] = x @ W[s]  (bf16 out, f32 acc) ----------------
def _make_presup_kernel(w_resident):
    def kernel(x_ref, w_ref, o_ref, acc_ref):
        k = pl.program_id(3)

        @pl.when(k == 0)
        def _():
            acc_ref[...] = jnp.zeros_like(acc_ref)

        if w_resident:
            w_blk = w_ref[pl.program_id(1)]      # full (F_pad, D_pad) slab, loaded once
        else:
            w_blk = w_ref[0]
        acc_ref[...] += jnp.dot(x_ref[...], w_blk,
                                preferred_element_type=jnp.float32)

        @pl.when(k == pl.num_programs(3) - 1)
        def _():
            o_ref[0] = acc_ref[...].astype(o_ref.dtype)

    return kernel


def presup_matmul(x_p, w_p, *, tm, tn, tk, w_resident, vmem_limit):
    """x_p: (N_pad, F_pad) bf16, w_p: (S, F_pad, D_pad) bf16 -> (S, N_pad, D_pad) bf16."""
    n_pad, f_pad = x_p.shape
    s_num, _, d_pad = w_p.shape
    grid = (n_pad // tm, s_num, d_pad // tn, f_pad // tk)

    if w_resident:
        # Whole weight stack resident in VMEM (constant block index -> single DMA).
        w_spec = pl.BlockSpec((s_num, f_pad, d_pad), lambda i, s, j, k: (0, 0, 0))
    else:
        w_spec = pl.BlockSpec((1, tk, tn), lambda i, s, j, k: (s, k, j))

    return pl.pallas_call(
        _make_presup_kernel(w_resident),
        out_shape=jax.ShapeDtypeStruct((s_num, n_pad, d_pad), jnp.bfloat16),
        grid_spec=pltpu.PrefetchScalarGridSpec(
            num_scalar_prefetch=0,
            grid=grid,
            in_specs=[
                pl.BlockSpec((tm, tk), lambda i, s, j, k: (i, k)),
                w_spec,
            ],
            out_specs=pl.BlockSpec((1, tm, tn), lambda i, s, j, k: (s, i, j)),
            scratch_shapes=[pltpu.VMEM((tm, tn), jnp.float32)],
        ),
        compiler_params=pltpu.CompilerParams(
            # N leads -> v7x megacore splits evenly even with a single support.
            dimension_semantics=("parallel", "parallel", "parallel", "arbitrary"),
            vmem_limit_bytes=vmem_limit),
    )(x_p, w_p)


# ------- Kernel 2: out = act(sum_s support[s] @ pre_sup[s] + bias)  (fused epilogue) -------
def _make_aggregate_kernel(act_func, p_resident):
    def kernel(a_ref, p_ref, b_ref, o_ref, acc_ref):
        s = pl.program_id(2)
        k = pl.program_id(3)

        @pl.when(jnp.logical_and(s == 0, k == 0))
        def _():
            acc_ref[...] = jnp.zeros_like(acc_ref)

        p_blk = p_ref[s] if p_resident else p_ref[0]
        acc_ref[...] += jnp.dot(a_ref[0], p_blk,
                                preferred_element_type=jnp.float32)

        @pl.when(jnp.logical_and(s == pl.num_programs(2) - 1,
                                 k == pl.num_programs(3) - 1))
        def _():
            out = acc_ref[...] + b_ref[...]           # bias is f32
            if act_func is not None:
                out = act_func(out)                   # fused elementwise activation
            o_ref[...] = out.astype(o_ref.dtype)      # single lane-dense store

    return kernel


def aggregate_matmul(supports_p, pre_sup, bias_p, *, act_func, tm, tn, tk,
                     p_resident, out_dtype, vmem_limit):
    """supports_p: (S, N_pad, N_pad) bf16, pre_sup: (S, N_pad, D_pad) bf16,
    bias_p: (1, D_pad) f32 -> (N_pad, D_pad) out_dtype."""
    s_num, n_pad, _ = supports_p.shape
    _, _, d_pad = pre_sup.shape
    grid = (n_pad // tm, d_pad // tn, s_num, n_pad // tk)

    if p_resident:
        # Entire pre_sup resident in VMEM: one HBM load total (constant block index).
        p_spec = pl.BlockSpec((s_num, n_pad, d_pad), lambda i, j, s, k: (0, 0, 0))
    else:
        p_spec = pl.BlockSpec((1, tk, tn), lambda i, j, s, k: (s, k, j))

    return pl.pallas_call(
        _make_aggregate_kernel(act_func, p_resident),
        out_shape=jax.ShapeDtypeStruct((n_pad, d_pad), out_dtype),
        grid_spec=pltpu.PrefetchScalarGridSpec(
            num_scalar_prefetch=0,
            grid=grid,
            in_specs=[
                pl.BlockSpec((1, tm, tk), lambda i, j, s, k: (s, i, k)),
                p_spec,
                pl.BlockSpec((1, tn), lambda i, j, s, k: (0, j)),
            ],
            out_specs=pl.BlockSpec((tm, tn), lambda i, j, s, k: (i, j)),
            scratch_shapes=[pltpu.VMEM((tm, tn), jnp.float32)],
        ),
        compiler_params=pltpu.CompilerParams(
            dimension_semantics=("parallel", "parallel", "arbitrary", "arbitrary"),
            vmem_limit_bytes=vmem_limit),
    )(supports_p, pre_sup, bias_p)


# ---------------- Wrapper ----------------
def graph_convolution(x, supports, weights, bias=None, act_func=None,
                      featureless=False, out_dtype=jnp.float32):
    """GCN layer forward:  out = act(sum_i support_i @ (x @ W_i) + b).

    x        : (N, F) node features (ignored if featureless)
    supports : (S, N, N) float, or the bf16/padded result of prepare_supports()
    weights  : (S, F, D) per-support weights, bias: (1, D) or None
    act_func : fused into the epilogue; must be ELEMENTWISE (relu/tanh/...),
               since it runs on the zero-padded tile before the [:N, :D] slice.
    out_dtype: jnp.float32 (default) or jnp.bfloat16 to feed another GCN layer.
    dropout_rate = 0.0 -> identity (eval semantics).
    # TODO(synk): stochastic dropout (rate > 0, training mode) not implemented.
    """
    S, F_in, D = weights.shape
    N = int(F_in) if featureless else int(x.shape[0])

    tm, N_pad, budget = _plan_n(N)
    tn, D_pad = _pick_tile(D, 512)       # D-wide output tile -> supports streamed once

    # supports: use the pre-prepared bf16/padded adjacency if given (no extra
    # HBM pass over the dominant S*N^2 array), else cast+pad here.
    if supports.dtype == jnp.bfloat16 and supports.shape == (S, N_pad, N_pad):
        A_p = supports
    else:
        assert supports.shape == (S, N, N), "supports must be (S, N, N)"
        A_p = jnp.pad(supports.astype(jnp.bfloat16),
                      ((0, 0), (0, N_pad - N), (0, N_pad - N)))

    if bias is None:
        b_p = jnp.zeros((1, D_pad), jnp.float32)
    else:
        b_p = jnp.pad(bias.astype(jnp.float32), ((0, 0), (0, D_pad - D)))

    # ---- pre_sup[s] = x @ W[s]  (bf16 operands, f32 MXU accumulation) ----
    if featureless:
        assert F_in == N, "featureless=True requires input_dim == num_nodes"
        pre = jnp.pad(weights.astype(jnp.bfloat16),
                      ((0, 0), (0, N_pad - N), (0, D_pad - D)))
    else:
        assert x.shape == (N, F_in), "x must be (N, input_dim)"
        F_pad = _round_up(F_in, 128)
        if F_pad <= 2048:
            tF = F_pad                    # full-depth F reduction: one RMW per tile
        else:
            tF, F_pad = _pick_tile(F_in, 2048)
        x_p = jnp.pad(x.astype(jnp.bfloat16), ((0, N_pad - N), (0, F_pad - F_in)))
        W_p = jnp.pad(weights.astype(jnp.bfloat16),
                      ((0, 0), (0, F_pad - F_in), (0, D_pad - D)))
        w_resident = (tF == F_pad and tn == D_pad and
                      2 * S * F_pad * D_pad * 2 <= budget // 3)
        pre = presup_matmul(x_p, W_p, tm=tm, tn=tn, tk=tF,
                            w_resident=w_resident, vmem_limit=budget)

    # ---- out = act(sum_s A[s] @ pre[s] + b) : choose reduction depth / residency ----
    acc_b = tm * tn * 4
    out_b = 2 * tm * tn * jnp.dtype(out_dtype).itemsize
    bias_b = 2 * tn * 4
    head = 8 << 20

    def agg_fits(tk, p_res):
        a_b = 2 * tm * tk * 2                                   # double-buffered A tile
        p_b = 2 * S * N_pad * D_pad * 2 if p_res else 2 * tk * tn * 2
        return a_b + p_b + acc_b + out_b + bias_b + head <= budget

    if tn == D_pad and N_pad <= 4096 and agg_fits(N_pad, True):
        tk_agg, p_resident = N_pad, True     # full-depth K, pre_sup resident in VMEM
    elif N_pad <= 4096 and agg_fits(N_pad, False):
        tk_agg, p_resident = N_pad, False    # full-depth K, pre_sup streamed
    else:
        tk_agg, p_resident = tm, False       # blocked-K fallback (very large graphs)

    out = aggregate_matmul(A_p, pre, b_p, act_func=act_func, tm=tm, tn=tn,
                           tk=tk_agg, p_resident=p_resident,
                           out_dtype=out_dtype, vmem_limit=budget)
    return out[:N, :D]


if __name__ == "__main__":
    # Small, deliberately non-128-aligned shapes to exercise the padding path.
    N, F, D, S = 200, 96, 72, 2   # nodes, input_dim, output_dim, num supports

    key = jax.random.PRNGKey(0)
    kx, ka, kw0, kw1 = jax.random.split(key, 4)

    x = jax.random.normal(kx, (N, F), jnp.float32)
    supports = jax.random.normal(ka, (S, N, N), jnp.float32) * 0.05

    # Parameter init mirroring __init__/reset_parameters:
    #   W0 <- xavier_uniform, W1 <- randn, b <- zeros
    limit = math.sqrt(6.0 / (F + D))
    w0 = jax.random.uniform(kw0, (F, D), jnp.float32, -limit, limit)
    w1 = jax.random.normal(kw1, (F, D), jnp.float32)
    W = jnp.stack([w0, w1], axis=0)          # (S, F, D)
    b = jnp.zeros((1, D), jnp.float32)       # (1, D)

    act = jax.nn.relu                        # exercises the fused activation epilogue

    # Adjacency is constant across layers / steps: cast+pad it ONCE here rather
    # than paying that HBM pass inside every forward call.
    A_prep = prepare_supports(supports)

    out = graph_convolution(x, A_prep, W, b, act_func=act, featureless=False)
    out = jax.block_until_ready(out)
    assert out.shape == (N, D)

    # Pure-JAX reference that mirrors the bf16-operand / f32-accumulate path.
    hp = jax.lax.Precision.HIGHEST
    xb = x.astype(jnp.bfloat16).astype(jnp.float32)
    Wb = W.astype(jnp.bfloat16).astype(jnp.float32)
    Ab = supports.astype(jnp.bfloat16).astype(jnp.float32)
    pre_ref = jnp.einsum("nf,sfd->snd", xb, Wb, precision=hp)
    pre_ref = pre_ref.astype(jnp.bfloat16).astype(jnp.float32)
    ref = jnp.einsum("snk,skd->nd", Ab, pre_ref, precision=hp) + b
    ref = act(ref)

    assert jnp.allclose(out, ref, atol=2e-2, rtol=2e-2), "mismatch vs reference"
    print("KERNEL_OK")
</pallas_src>

<mosaic_0001>
module attributes {stable_mosaic.version = 11 : i64} {
  func.func @kernel(%arg0: i32, %arg1: i32, %arg2: i32, %arg3: i32, %arg4: memref<256x128xbf16, #tpu.memory_space<vmem>>, %arg5: memref<2x128x128xbf16, #tpu.memory_space<vmem>>, %arg6: memref<1x256x128xbf16, #tpu.memory_space<vmem>>, %arg7: memref<256x128xf32, #tpu.memory_space<vmem>>) attributes {dimension_semantics = [#tpu.dimension_semantics<parallel>, #tpu.dimension_semantics<parallel>, #tpu.dimension_semantics<parallel>, #tpu.dimension_semantics<arbitrary>], iteration_bounds = array<i64: 1, 2, 1, 1>, scalar_prefetch = 0 : i64, scratch_operands = 1 : i64, tpu.core_type = #tpu.core_type<tc>, window_params = [{transform_indices = @transform_0, window_bounds = array<i64: 256, 128>}, {pipeline_mode = #tpu.pipeline_mode<synchronous>, transform_indices = @transform_1, window_bounds = array<i64: 2, 128, 128>}, {transform_indices = @transform_2, window_bounds = array<i64: 1, 256, 128>}]} {
    %c0_i32 = arith.constant 0 : i32
    %0 = arith.cmpi eq, %arg3, %c0_i32 : i32
    %1 = arith.extui %0 : i1 to i32
    %c0_i32_0 = arith.constant 0 : i32
    %2 = arith.cmpi ne, %1, %c0_i32_0 : i32
    scf.if %2 {
      %cst_10 = arith.constant 0.000000e+00 : f32
      %14 = vector.broadcast %cst_10 : f32 to vector<256x128xf32>
      %c0_11 = arith.constant 0 : index
      %c0_12 = arith.constant 0 : index
      %15 = vector.load %arg7[%c0_11, %c0_12] : memref<256x128xf32, #tpu.memory_space<vmem>>, vector<256x128xf32>
      tpu.vector_store %arg7[%c0_11, %c0_12], %14 {strides = array<i32>} : memref<256x128xf32, #tpu.memory_space<vmem>>, vector<256x128xf32>,
    } else {
    }
    %3 = arith.index_cast %arg1 : i32 to index
    %c0 = arith.constant 0 : index
    %c0_1 = arith.constant 0 : index
    %4 = vector.load %arg5[%3, %c0, %c0_1] : memref<2x128x128xbf16, #tpu.memory_space<vmem>>, vector<1x128x128xbf16>
    %5 = vector.shape_cast %4 : vector<1x128x128xbf16> to vector<128x128xbf16>
    %c0_2 = arith.constant 0 : index
    %c0_3 = arith.constant 0 : index
    %6 = vector.load %arg7[%c0_2, %c0_3] : memref<256x128xf32, #tpu.memory_space<vmem>>, vector<256x128xf32>
    %c0_4 = arith.constant 0 : index
    %c0_5 = arith.constant 0 : index
    %7 = vector.load %arg4[%c0_4, %c0_5] : memref<256x128xbf16, #tpu.memory_space<vmem>>, vector<256x128xbf16>
    %cst = arith.constant dense<0.000000e+00> : vector<256x128xf32>
    %8 = tpu.matmul %7, %5, %cst {dimension_numbers = #tpu.dot_dimension_numbers<[1], [0], [0], [1], [0, 0, 1, 1], [], []>} : vector<256x128xbf16>, vector<128x128xbf16>, vector<256x128xf32> -> vector<256x128xf32>
    %9 = arith.addf %6, %8 : vector<256x128xf32>
    %c0_6 = arith.constant 0 : index
    %c0_7 = arith.constant 0 : index
    %10 = vector.load %arg7[%c0_6, %c0_7] : memref<256x128xf32, #tpu.memory_space<vmem>>, vector<256x128xf32>
    tpu.vector_store %arg7[%c0_6, %c0_7], %9 {strides = array<i32>} : memref<256x128xf32, #tpu.memory_space<vmem>>, vector<256x128xf32>,
    %c0_i32_8 = arith.constant 0 : i32
    %11 = arith.cmpi eq, %arg3, %c0_i32_8 : i32
    %12 = arith.extui %11 : i1 to i32
    %c0_i32_9 = arith.constant 0 : i32
    %13 = arith.cmpi ne, %12, %c0_i32_9 : i32
    scf.if %13 {
      %c0_10 = arith.constant 0 : index
      %c0_11 = arith.constant 0 : index
      %14 = vector.load %arg7[%c0_10, %c0_11] : memref<256x128xf32, #tpu.memory_space<vmem>>, vector<256x128xf32>
      %15 = arith.truncf %14 : vector<256x128xf32> to vector<256x128xbf16>
      %c0_12 = arith.constant 0 : index
      %c0_13 = arith.constant 0 : index
      %c0_14 = arith.constant 0 : index
      %16 = vector.load %arg6[%c0_12, %c0_13, %c0_14] : memref<1x256x128xbf16, #tpu.memory_space<vmem>>, vector<1x256x128xbf16>
      %17 = vector.shape_cast %16 : vector<1x256x128xbf16> to vector<256x128xbf16>
      %18 = vector.shape_cast %15 : vector<256x128xbf16> to vector<1x256x128xbf16>
      tpu.vector_store %arg6[%c0_12, %c0_13, %c0_14], %18 {strides = array<i32>} : memref<1x256x128xbf16, #tpu.memory_space<vmem>>, vector<1x256x128xbf16>,
    } else {
    }
    return
  }
  func.func @transform_0(%arg0: i32, %arg1: i32, %arg2: i32, %arg3: i32) -> (i32, i32) {
    %c0_i32 = arith.constant 0 : i32
    return %arg0, %arg3 : i32, i32
  }
  func.func @transform_1(%arg0: i32, %arg1: i32, %arg2: i32, %arg3: i32) -> (i32, i32, i32) {
    %c0_i32 = arith.constant 0 : i32
    %c0_i32_0 = arith.constant 0 : i32
    %c0_i32_1 = arith.constant 0 : i32
    %c0_i32_2 = arith.constant 0 : i32
    return %c0_i32, %c0_i32_0, %c0_i32_1 : i32, i32, i32
  }
  func.func @transform_2(%arg0: i32, %arg1: i32, %arg2: i32, %arg3: i32) -> (i32, i32, i32) {
    %c0_i32 = arith.constant 0 : i32
    return %arg1, %arg0, %arg2 : i32, i32, i32
  }
}

</mosaic_0001>

<llo_original>
// kernel: tpu_custom_call.1
$region0: #{tpu_custom_call.1}
  #allocation0 [shape = 'u32[]', space=smem, size = 0x4, offset = 0x4, fixed_abs, tag = 'smem constant byte address 0x4 - core index']
  #allocation1 [shape = 'u32[144,128]{1,0:T(1,128)}', space=vmem, size = 0x12000, scoped, tag = 'internal scratch']
  #allocation2 [shape = 'f32[256,128]{1,0:T(8,128)}', space=vmem, size = 0x20000, scoped, tag = 'scratch operand']
  %s0 = inlined_call_operand.hbm [shape: bf16[256,128], index: 0, kind: input, shape index: {}]
  %s1 = inlined_call_operand.hbm [shape: bf16[2,128,128], index: 1, kind: input, shape index: {}]
  %s2 = inlined_call_operand.hbm [shape: bf16[2,256,128], index: 2, kind: output, shape index: {}]
  %s3 = sld [smem:[#allocation0]]
  $region57: #{tpu_custom_call.1} parent=0
    _
  %s5 = ssub.s32 1, %s3
  %s6 = scalar_select 0, %s5, %s3
  $region1: #{tpu_custom_call.1} parent=0
    #allocation3 [shape = 'u8[65536]{0}', space=vmem, size = 0x10000, scoped, tag = 'input window, operand 0, single buffered']
    #allocation4 [shape = 's32[2]{0}', space=sflag, size = 0x8, scoped, tag = 'scoped memory for tpu_custom_call.1']
    #allocation5 [shape = 's32[2]{0}', space=sflag, size = 0x8, scoped, tag = 'scoped memory for tpu_custom_call.1']
    #allocation6 [shape = 'u8[65536]{0}', space=vmem, size = 0x10000, scoped, tag = 'input window, operand 1, single buffered']
    #allocation7 [shape = 's32[1]{0}', space=sflag, size = 0x4, scoped, tag = 'scoped memory for tpu_custom_call.1']
    #allocation8 [shape = 'u8[131072]{0}', space=vmem, size = 0x20000, scoped, tag = 'output window, operand 0']
    %7 = vsyncpa [#allocation4], 0
    %8 = vsyncpa [#allocation7], 0
    %9 = vsyncpa [#allocation5], 0
    %s10 = scalar_lea.sflag [#allocation5], 1
    %11 = vsyncpa %s10, 0
    loop: start=0, step=1, limit=4
    $region2: #{tpu_custom_call.1} parent=1 // loop_pre_header
      _
    $region3: #{tpu_custom_call.1} parent=1 // loop_header
      %s13 = sphi 0, %s17
      %p14 = scmp.ge.s32.totalorder %s13, 4
      %s20 = sphi 0, %s46
      %s21 = sphi 0, %s42
      %s22 = sphi 0, %s38
      %s23 = sphi 0, %s34
      %s24 = sphi 0, %s20
      %s25 = sphi 0, %s21
      %s26 = sphi 0, %s22
      %s27 = sphi 0, %s23
      %s28 = sphi 0, %s24
      %s29 = sphi 0, %s25
      %s30 = sphi 0, %s26
      %s31 = sphi 0, %s27
      %s51 = sphi 0, %s53
      %s54 = sphi 0, %s51
      %s55 = sphi 0, %s54
      %s71 = sphi 0, %s55
      %s75 = sphi 0, %s75
      %s77 = sphi 0, %s75
      %s78 = sphi 0, %s77
      %s92 = sphi 0, %s78
      %s102 = sphi 0, %s104
      %s105 = sphi 0, %s102
      %s106 = sphi 0, %s105
      %s122 = sphi 0, %s106
    $region4: #{tpu_custom_call.1} parent=1 // loop_header_branch
      %16 = sbr.rel (%p14) target = $region8
    $region5: #{tpu_custom_call.1} parent=1 // loop_body
      %s18 = ssub.s32 %s13, 1
      %s19 = ssub.s32 %s13, 2
      %s32 = sadd.s32 1, %s23
      %p33 = scmp.ge.s32.totalorder %s32, 1
      %s34 = scalar_select %p33, 0, %s32
      %s35 = sadd.s32 1, %s22
      %s36 = scalar_select %p33, %s35, %s22
      %p37 = scmp.ge.s32.totalorder %s36, 1
      %s38 = scalar_select %p37, 0, %s36
      %s39 = sadd.s32 1, %s21
      %s40 = scalar_select %p37, %s39, %s21
      %p41 = scmp.ge.s32.totalorder %s40, 2
      %s42 = scalar_select %p41, 0, %s40
      %s43 = sadd.s32 1, %s20
      %s44 = scalar_select %p41, %s43, %s20
      %p45 = scmp.ge.s32.totalorder %s44, 1
      %s46 = scalar_select %p45, 0, %s44
      %s47 = ssub.s32 %s20, %s46
      %s48 = ssub.s32 %s23, %s34
      %s49 = sor.u32 %s47, %s48
      %p50 = scmp.eq.s32.totalorder %s49, 0
      %s52 = sadd.s32 %s51, 1
      %s53 = scalar_select %p50, %s51, %s52
      %p56 = pneg %p50
      %p57 = scmp.eq.s32.totalorder %s13, 1
      %p58 = por %p56, %p57
      %p59 = scmp.ne.s32.totalorder %s51, %s54
      %p60 = scmp.eq.s32.totalorder %s13, 0
      %p61 = por %p59, %p60
      %p62 = scmp.ne.s32.totalorder %s51, %s54
      %p63 = scmp.eq.s32.totalorder %s18, 1
      %p64 = por %p62, %p63
      %p65 = scmp.ne.s32.totalorder %s54, %s55
      %p66 = scmp.eq.s32.totalorder %s18, 0
      %p67 = por %p65, %p66
      %p68 = scmp.ne.s32.totalorder %s54, %s55
      %p69 = scmp.eq.s32.totalorder %s19, 1
      %p70 = por %p68, %p69
      %p72 = scmp.ne.s32.totalorder %s55, %s71
      %p73 = scmp.eq.s32.totalorder %s19, 0
      %p74 = por %p72, %p73
      %s76 = sadd.s32 %s75, 1
      %p79 = scmp.eq.s32.totalorder %s13, 1
      %p80 = scmp.ne.s32.totalorder %s75, %s77
      %p81 = scmp.eq.s32.totalorder %s13, 0
      %p82 = por %p80, %p81
      %p83 = scmp.ne.s32.totalorder %s75, %s77
      %p84 = scmp.eq.s32.totalorder %s18, 1
      %p85 = por %p83, %p84
      %p86 = scmp.ne.s32.totalorder %s77, %s78
      %p87 = scmp.eq.s32.totalorder %s18, 0
      %p88 = por %p86, %p87
      %p89 = scmp.ne.s32.totalorder %s77, %s78
      %p90 = scmp.eq.s32.totalorder %s19, 1
      %p91 = por %p89, %p90
      %p93 = scmp.ne.s32.totalorder %s78, %s92
      %p94 = scmp.eq.s32.totalorder %s19, 0
      %p95 = por %p93, %p94
      %s96 = ssub.s32 %s21, %s42
      %s97 = ssub.s32 %s20, %s46
      %s98 = sor.u32 %s96, %s97
      %s99 = ssub.s32 %s22, %s38
      %s100 = sor.u32 %s98, %s99
      %p101 = scmp.eq.s32.totalorder %s100, 0
      %s103 = sadd.s32 %s102, 1
      %s104 = scalar_select %p101, %s102, %s103
      %p107 = pneg %p101
      %p108 = scmp.eq.s32.totalorder %s13, 1
      %p109 = por %p107, %p108
      %p110 = scmp.ne.s32.totalorder %s102, %s105
      %p111 = scmp.eq.s32.totalorder %s13, 0
      %p112 = por %p110, %p111
      %p113 = scmp.ne.s32.totalorder %s102, %s105
      %p114 = scmp.eq.s32.totalorder %s18, 1
      %p115 = por %p113, %p114
      %p116 = scmp.ne.s32.totalorder %s105, %s106
      %p117 = scmp.eq.s32.totalorder %s18, 0
      %p118 = por %p116, %p117
      %p119 = scmp.ne.s32.totalorder %s105, %s106
      %p120 = scmp.eq.s32.totalorder %s19, 1
      %p121 = por %p119, %p120
      %p123 = scmp.ne.s32.totalorder %s106, %s122
      %p124 = scmp.eq.s32.totalorder %s19, 0
      %p125 = por %p123, %p124
      %p126 = scmp.le.s32.totalorder 1, %s13
      %p127 = scmp.lt.s32.totalorder %s13, 3
      %p128 = pnand %p126, %p127
      %p129 = pneg %p128
      // Predicated region
      $region9: #{tpu_custom_call.1} parent=5 // pred_check
        _
      $region10: #{tpu_custom_call.1} parent=5 // pred_check_branch
        %131 = sbr.rel (%p128) target = $region12
      $region11: #{tpu_custom_call.1} parent=5 // pred_region
        %s132 = ssub.s32 %s13, 1
        // Predicated region
        $region13: #{tpu_custom_call.1} parent=11 // pred_check
          %p133 = pneg %p67
        $region14: #{tpu_custom_call.1} parent=11 // pred_check_branch
          %135 = sbr.rel (%p133) target = $region16
        $region15: #{tpu_custom_call.1} parent=11 // pred_region
          %s136 = smul.u32 32, %s24
          %s138 = ssub.s32 2048, 2048
          %139 = vsyncadd [#allocation4], %s138
          %s140 = sadd.s32 %s27, %s136
          %s141 = smul.addr %s140, 64
          %s142 = scalar_lea.hbm %s0, %s141
          %s143 = sshll.u32 [#allocation3], 4
          %s144 = int_to_ptr.vmem [resolvable:$true] %s143
          %149 = dma.hbm_to_vmem [thread:$0]  %s142, 2048, %s144, [#allocation4], 64, 64, 4
        $region16: #{tpu_custom_call.1} parent=11 // pred_fallthru
          _
        // Predicated region
        $region17: #{tpu_custom_call.1} parent=11 // pred_check
          %p150 = pneg %p88
        $region18: #{tpu_custom_call.1} parent=11 // pred_check_branch
          %152 = sbr.rel (%p150) target = $region20
        $region19: #{tpu_custom_call.1} parent=11 // pred_region
          %s154 = ssub.s32 2048, 2048
          %155 = vsyncadd [#allocation7], %s154
          %s156 = sshll.u32 [#allocation6], 4
          %s157 = int_to_ptr.vmem [resolvable:$true] %s156
          %162 = dma.hbm_to_vmem [thread:$0]  %s1, 2048, %s157, [#allocation7], 64, 64, 4
        $region20: #{tpu_custom_call.1} parent=11 // pred_fallthru
          _
      $region12: #{tpu_custom_call.1} parent=5 // pred_fallthru
        _
      %p163 = scmp.lt.s32.totalorder %s13, 2
      // Predicated region
      $region21: #{tpu_custom_call.1} parent=5 // pred_check
        %p164 = pneg %p163
      $region22: #{tpu_custom_call.1} parent=5 // pred_check_branch
        %166 = sbr.rel (%p164) target = $region24
      $region23: #{tpu_custom_call.1} parent=5 // pred_region
        _
      $region24: #{tpu_custom_call.1} parent=5 // pred_fallthru
        _
      %p167 = scmp.le.s32.totalorder 1, %s13
      %p168 = scmp.lt.s32.totalorder %s13, 3
      %p169 = pnand %p167, %p168
      %p170 = pneg %p169
      // Predicated region
      $region25: #{tpu_custom_call.1} parent=5 // pred_check
        _
      $region26: #{tpu_custom_call.1} parent=5 // pred_check_branch
        %172 = sbr.rel (%p169) target = $region28
      $region27: #{tpu_custom_call.1} parent=5 // pred_region
        %s173 = ssub.s32 %s13, 1
        // Predicated region
        $region29: #{tpu_custom_call.1} parent=27 // pred_check
          %p174 = pneg %p67
        $region30: #{tpu_custom_call.1} parent=27 // pred_check_branch
          %176 = sbr.rel (%p174) target = $region32
        $region31: #{tpu_custom_call.1} parent=27 // pred_region
          %177 = dma.done [#allocation4], 2048
        $region32: #{tpu_custom_call.1} parent=27 // pred_fallthru
          _
        // Predicated region
        $region33: #{tpu_custom_call.1} parent=27 // pred_check
          %p178 = pneg %p88
        $region34: #{tpu_custom_call.1} parent=27 // pred_check_branch
          %180 = sbr.rel (%p178) target = $region36
        $region35: #{tpu_custom_call.1} parent=27 // pred_region
          %181 = dma.done [#allocation7], 2048
        $region36: #{tpu_custom_call.1} parent=27 // pred_fallthru
          _
        %p182 = pneg %p67
        %p183 = pneg %p64
        %p184 = pneg %p88
        %p185 = pneg %p85
        %p186 = pneg %p118
        %p187 = pneg %p115
        %s188 = sand.u32 %s105, 1
        %s189 = scalar_lea.sflag [#allocation5], %s188
        %s190 = sand.u32 %s105, 1
        %s191 = smul.addr %s190, 128
        %s192 = scalar_lea.vmem [#allocation8], %s191
        %s193 = smul.u32 32, %s24
        %s194 = smul.u32 32, %s24
        %p196 = scmp.eq.s32.totalorder %s27, 0
        // Predicated region
        $region37: #{tpu_custom_call.1} parent=27 // pred_check
          %p197 = pneg %p196
        $region38: #{tpu_custom_call.1} parent=27 // pred_check_branch
          %199 = sbr.rel (%p197) target = $region40
        $region39: #{tpu_custom_call.1} parent=27 // pred_region
          %200 = vst [vmem:[#allocation2] sm:$0xff] 0.0
          %201 = vst [vmem:[#allocation2 + $0x8] sm:$0xff] 0.0
          %202 = vst [vmem:[#allocation2 + $0x10] sm:$0xff] 0.0
          %203 = vst [vmem:[#allocation2 + $0x18] sm:$0xff] 0.0
          %204 = vst [vmem:[#allocation2 + $0x20] sm:$0xff] 0.0
          %205 = vst [vmem:[#allocation2 + $0x28] sm:$0xff] 0.0
          %206 = vst [vmem:[#allocation2 + $0x30] sm:$0xff] 0.0
          %207 = vst [vmem:[#allocation2 + $0x38] sm:$0xff] 0.0
          %208 = vst [vmem:[#allocation2 + $0x40] sm:$0xff] 0.0
          %209 = vst [vmem:[#allocation2 + $0x48] sm:$0xff] 0.0
          %210 = vst [vmem:[#allocation2 + $0x50] sm:$0xff] 0.0
          %211 = vst [vmem:[#allocation2 + $0x58] sm:$0xff] 0.0
          %212 = vst [vmem:[#allocation2 + $0x60] sm:$0xff] 0.0
          %213 = vst [vmem:[#allocation2 + $0x68] sm:$0xff] 0.0
          %214 = vst [vmem:[#allocation2 + $0x70] sm:$0xff] 0.0
          %215 = vst [vmem:[#allocation2 + $0x78] sm:$0xff] 0.0
          %216 = vst [vmem:[#allocation2 + $0x80] sm:$0xff] 0.0
          %217 = vst [vmem:[#allocation2 + $0x88] sm:$0xff] 0.0
          %218 = vst [vmem:[#allocation2 + $0x90] sm:$0xff] 0.0
          %219 = vst [vmem:[#allocation2 + $0x98] sm:$0xff] 0.0
          %220 = vst [vmem:[#allocation2 + $0xa0] sm:$0xff] 0.0
          %221 = vst [vmem:[#allocation2 + $0xa8] sm:$0xff] 0.0
          %222 = vst [vmem:[#allocation2 + $0xb0] sm:$0xff] 0.0
          %223 = vst [vmem:[#allocation2 + $0xb8] sm:$0xff] 0.0
          %224 = vst [vmem:[#allocation2 + $0xc0] sm:$0xff] 0.0
          %225 = vst [vmem:[#allocation2 + $0xc8] sm:$0xff] 0.0
          %226 = vst [vmem:[#allocation2 + $0xd0] sm:$0xff] 0.0
          %227 = vst [vmem:[#allocation2 + $0xd8] sm:$0xff] 0.0
          %228 = vst [vmem:[#allocation2 + $0xe0] sm:$0xff] 0.0
          %229 = vst [vmem:[#allocation2 + $0xe8] sm:$0xff] 0.0
          %230 = vst [vmem:[#allocation2 + $0xf0] sm:$0xff] 0.0
          %231 = vst [vmem:[#allocation2 + $0xf8] sm:$0xff] 0.0
        $region40: #{tpu_custom_call.1} parent=27 // pred_fallthru
          _
        %s232 = smul.u32 %s25, 16
        %s233 = smul.addr %s232, 4
        %s234 = scalar_lea.vmem [#allocation6], %s233
        %v235 = vld [vmem:[%s234] sm:$0xf]
        %v236 = vld [vmem:[%s234 + $0x4] sm:$0xf]
        %v237 = vld [vmem:[%s234 + $0x8] sm:$0xf]
        %v238 = vld [vmem:[%s234 + $0xc] sm:$0xf]
        %v239 = vld [vmem:[%s234 + $0x10] sm:$0xf]
        %v240 = vld [vmem:[%s234 + $0x14] sm:$0xf]
        %v241 = vld [vmem:[%s234 + $0x18] sm:$0xf]
        %v242 = vld [vmem:[%s234 + $0x1c] sm:$0xf]
        %v243 = vld [vmem:[%s234 + $0x20] sm:$0xf]
        %v244 = vld [vmem:[%s234 + $0x24] sm:$0xf]
        %v245 = vld [vmem:[%s234 + $0x28] sm:$0xf]
        %v246 = vld [vmem:[%s234 + $0x2c] sm:$0xf]
        %v247 = vld [vmem:[%s234 + $0x30] sm:$0xf]
        %v248 = vld [vmem:[%s234 + $0x34] sm:$0xf]
        %v249 = vld [vmem:[%s234 + $0x38] sm:$0xf]
        %v250 = vld [vmem:[%s234 + $0x3c] sm:$0xf]
        %v251 = vld [vmem:[#allocation2] sm:$0xff]
        %v252 = vld [vmem:[#allocation2 + $0x8] sm:$0xff]
        %v253 = vld [vmem:[#allocation2 + $0x10] sm:$0xff]
        %v254 = vld [vmem:[#allocation2 + $0x18] sm:$0xff]
        %v255 = vld [vmem:[#allocation2 + $0x20] sm:$0xff]
        %v256 = vld [vmem:[#allocation2 + $0x28] sm:$0xff]
        %v257 = vld [vmem:[#allocation2 + $0x30] sm:$0xff]
        %v258 = vld [vmem:[#allocation2 + $0x38] sm:$0xff]
        %v259 = vld [vmem:[#allocation2 + $0x40] sm:$0xff]
        %v260 = vld [vmem:[#allocation2 + $0x48] sm:$0xff]
        %v261 = vld [vmem:[#allocation2 + $0x50] sm:$0xff]
        %v262 = vld [vmem:[#allocation2 + $0x58] sm:$0xff]
        %v263 = vld [vmem:[#allocation2 + $0x60] sm:$0xff]
        %v264 = vld [vmem:[#allocation2 + $0x68] sm:$0xff]
        %v265 = vld [vmem:[#allocation2 + $0x70] sm:$0xff]
        %v266 = vld [vmem:[#allocation2 + $0x78] sm:$0xff]
        %v267 = vld [vmem:[#allocation2 + $0x80] sm:$0xff]
        %v268 = vld [vmem:[#allocation2 + $0x88] sm:$0xff]
        %v269 = vld [vmem:[#allocation2 + $0x90] sm:$0xff]
        %v270 = vld [vmem:[#allocation2 + $0x98] sm:$0xff]
        %v271 = vld [vmem:[#allocation2 + $0xa0] sm:$0xff]
        %v272 = vld [vmem:[#allocation2 + $0xa8] sm:$0xff]
        %v273 = vld [vmem:[#allocation2 + $0xb0] sm:$0xff]
        %v274 = vld [vmem:[#allocation2 + $0xb8] sm:$0xff]
        %v275 = vld [vmem:[#allocation2 + $0xc0] sm:$0xff]
        %v276 = vld [vmem:[#allocation2 + $0xc8] sm:$0xff]
        %v277 = vld [vmem:[#allocation2 + $0xd0] sm:$0xff]
        %v278 = vld [vmem:[#allocation2 + $0xd8] sm:$0xff]
        %v279 = vld [vmem:[#allocation2 + $0xe0] sm:$0xff]
        %v280 = vld [vmem:[#allocation2 + $0xe8] sm:$0xff]
        %v281 = vld [vmem:[#allocation2 + $0xf0] sm:$0xff]
        %v282 = vld [vmem:[#allocation2 + $0xf8] sm:$0xff]
        %v283 = vld [vmem:[#allocation3] sm:$0xf]
        %v284 = vld [vmem:[#allocation3 + $0x4] sm:$0xf]
        %v285 = vld [vmem:[#allocation3 + $0x8] sm:$0xf]
        %v286 = vld [vmem:[#allocation3 + $0xc] sm:$0xf]
        %v287 = vld [vmem:[#allocation3 + $0x10] sm:$0xf]
        %v288 = vld [vmem:[#allocation3 + $0x14] sm:$0xf]
        %v289 = vld [vmem:[#allocation3 + $0x18] sm:$0xf]
        %v290 = vld [vmem:[#allocation3 + $0x1c] sm:$0xf]
        %v291 = vld [vmem:[#allocation3 + $0x20] sm:$0xf]
        %v292 = vld [vmem:[#allocation3 + $0x24] sm:$0xf]
        %v293 = vld [vmem:[#allocation3 + $0x28] sm:$0xf]
        %v294 = vld [vmem:[#allocation3 + $0x2c] sm:$0xf]
        %v295 = vld [vmem:[#allocation3 + $0x30] sm:$0xf]
        %v296 = vld [vmem:[#allocation3 + $0x34] sm:$0xf]
        %v297 = vld [vmem:[#allocation3 + $0x38] sm:$0xf]
        %v298 = vld [vmem:[#allocation3 + $0x3c] sm:$0xf]
        %v299 = vld [vmem:[#allocation3 + $0x40] sm:$0xf]
        %v300 = vld [vmem:[#allocation3 + $0x44] sm:$0xf]
        %v301 = vld [vmem:[#allocation3 + $0x48] sm:$0xf]
        %v302 = vld [vmem:[#allocation3 + $0x4c] sm:$0xf]
        %v303 = vld [vmem:[#allocation3 + $0x50] sm:$0xf]
        %v304 = vld [vmem:[#allocation3 + $0x54] sm:$0xf]
        %v305 = vld [vmem:[#allocation3 + $0x58] sm:$0xf]
        %v306 = vld [vmem:[#allocation3 + $0x5c] sm:$0xf]
        %v307 = vld [vmem:[#allocation3 + $0x60] sm:$0xf]
        %v308 = vld [vmem:[#allocation3 + $0x64] sm:$0xf]
        %v309 = vld [vmem:[#allocation3 + $0x68] sm:$0xf]
        %v310 = vld [vmem:[#allocation3 + $0x6c] sm:$0xf]
        %v311 = vld [vmem:[#allocation3 + $0x70] sm:$0xf]
        %v312 = vld [vmem:[#allocation3 + $0x74] sm:$0xf]
        %v313 = vld [vmem:[#allocation3 + $0x78] sm:$0xf]
        %v314 = vld [vmem:[#allocation3 + $0x7c] sm:$0xf]
        %v347 = vunpack.c.l.b16 %v283
        %v348 = vunpack.c.l.b16 %v284
        %v349 = vunpack.c.l.b16 %v285
        %v350 = vunpack.c.l.b16 %v286
        %v351 = vunpack.c.l.b16 %v287
        %v352 = vunpack.c.l.b16 %v288
        %v353 = vunpack.c.l.b16 %v289
        %v354 = vunpack.c.l.b16 %v290
        %v355 = vunpack.c.l.b16 %v291
        %v356 = vunpack.c.l.b16 %v292
        %v357 = vunpack.c.l.b16 %v293
        %v358 = vunpack.c.l.b16 %v294
        %v359 = vunpack.c.l.b16 %v295
        %v360 = vunpack.c.l.b16 %v296
        %v361 = vunpack.c.l.b16 %v297
        %v362 = vunpack.c.l.b16 %v298
        %v363 = vunpack.c.l.b16 %v299
        %v364 = vunpack.c.l.b16 %v300
        %v365 = vunpack.c.l.b16 %v301
        %v366 = vunpack.c.l.b16 %v302
        %v367 = vunpack.c.l.b16 %v303
        %v368 = vunpack.c.l.b16 %v304
        %v369 = vunpack.c.l.b16 %v305
        %v370 = vunpack.c.l.b16 %v306
        %v371 = vunpack.c.l.b16 %v307
        %v372 = vunpack.c.l.b16 %v308
        %v373 = vunpack.c.l.b16 %v309
        %v374 = vunpack.c.l.b16 %v310
        %v375 = vunpack.c.l.b16 %v311
        %v376 = vunpack.c.l.b16 %v312
        %v377 = vunpack.c.l.b16 %v313
        %v378 = vunpack.c.l.b16 %v314
        %v379 = vpack.c.b16 %v348, %v347
        %v380 = vpack.c.b16 %v350, %v349
        %v381 = vpack.c.b16 %v352, %v351
        %v382 = vpack.c.b16 %v354, %v353
        %v383 = vpack.c.b16 %v356, %v355
        %v384 = vpack.c.b16 %v358, %v357
        %v385 = vpack.c.b16 %v360, %v359
        %v386 = vpack.c.b16 %v362, %v361
        %v387 = vpack.c.b16 %v364, %v363
        %v388 = vpack.c.b16 %v366, %v365
        %v389 = vpack.c.b16 %v368, %v367
        %v390 = vpack.c.b16 %v370, %v369
        %v391 = vpack.c.b16 %v372, %v371
        %v392 = vpack.c.b16 %v374, %v373
        %v393 = vpack.c.b16 %v376, %v375
        %v394 = vpack.c.b16 %v378, %v377
        %v427 = vunpack.c.l.b16 %v235
        %v428 = vunpack.c.l.b16 %v236
        %v429 = vunpack.c.l.b16 %v237
        %v430 = vunpack.c.l.b16 %v238
        %v431 = vunpack.c.l.b16 %v239
        %v432 = vunpack.c.l.b16 %v240
        %v433 = vunpack.c.l.b16 %v241
        %v434 = vunpack.c.l.b16 %v242
        %v435 = vunpack.c.l.b16 %v243
        %v436 = vunpack.c.l.b16 %v244
        %v437 = vunpack.c.l.b16 %v245
        %v438 = vunpack.c.l.b16 %v246
        %v439 = vunpack.c.l.b16 %v247
        %v440 = vunpack.c.l.b16 %v248
        %v441 = vunpack.c.l.b16 %v249
        %v442 = vunpack.c.l.b16 %v250
        %v443 = vpack.c.b16 %v428, %v427
        %v444 = vpack.c.b16 %v430, %v429
        %v445 = vpack.c.b16 %v432, %v431
        %v446 = vpack.c.b16 %v434, %v433
        %v447 = vpack.c.b16 %v436, %v435
        %v448 = vpack.c.b16 %v438, %v437
        %v449 = vpack.c.b16 %v440, %v439
        %v450 = vpack.c.b16 %v442, %v441
        %459 = vmatprep.subr.bf16.mxu0 0
        %460 = vmatpush1.bf16.msra.mxu0 %v443
        %461 = vmatprep.subr.bf16.mxu0 0
        %462 = vmatpush1.bf16.msra.mxu0 %v444
        %463 = vmatprep.subr.bf16.mxu0 0
        %464 = vmatpush1.bf16.msra.mxu0 %v445
        %465 = vmatprep.subr.bf16.mxu0 0
        %466 = vmatpush1.bf16.msra.mxu0 %v446
        %467 = vmatprep.subr.bf16.mxu0 0
        %468 = vmatpush1.bf16.msra.mxu0 %v447
        %469 = vmatprep.subr.bf16.mxu0 0
        %470 = vmatpush1.bf16.msra.mxu0 %v448
        %471 = vmatprep.subr.bf16.mxu0 0
        %472 = vmatpush1.bf16.msra.mxu0 %v449
        %473 = vmatprep.subr.bf16.mxu0 0
        %474 = vmatpush1.bf16.msra.mxu0 %v450
        %475 = vmatprep.subr.bf16.mxu0 0
        %476 = vmatpush1.bf16.msra.mxu0 0
        %477 = vmatprep.subr.bf16.mxu0 0
        %478 = vmatpush1.bf16.msra.mxu0 0
        %479 = vmatprep.subr.bf16.mxu0 0
        %480 = vmatpush1.bf16.msra.mxu0 0
        %481 = vmatprep.subr.bf16.mxu0 0
        %482 = vmatpush1.bf16.msra.mxu0 0
        %483 = vmatprep.subr.bf16.mxu0 0
        %484 = vmatpush1.bf16.msra.mxu0 0
        %485 = vmatprep.subr.bf16.mxu0 0
        %486 = vmatpush1.bf16.msra.mxu0 0
        %487 = vmatprep.subr.bf16.mxu0 0
        %488 = vmatpush1.bf16.msra.mxu0 0
        %489 = vmatprep.subr.bf16.mxu0 0
        %490 = vmatpush1.bf16.msra.mxu0 0
        %491 = vmatprep.mubr.bf16.mxu0 0
        %492 = vmatmul.mubr.bf16.gmra.mrb[0].mxu0 %v379
        %v493 = vpop.f32.mrb[0].mxu0
        %v494 = vadd.f32 0.0, %v493
        %v495 = vpop.f32.mrb[0].mxu0
        %v496 = vpop.f32.mrb[0].mxu0
        %v497 = vadd.f32 0.0, %v496
        %v498 = vpop.f32.mrb[0].mxu0
        %499 = vmatprep.mubr.bf16.mxu0 0
        %500 = vmatmul.mubr.bf16.gmra.mrb[0].mxu0 %v380
        %v501 = vpop.f32.mrb[0].mxu0
        %v502 = vadd.f32 0.0, %v501
        %v503 = vpop.f32.mrb[0].mxu0
        %v504 = vpop.f32.mrb[0].mxu0
        %v505 = vadd.f32 0.0, %v504
        %v506 = vpop.f32.mrb[0].mxu0
        %507 = vmatprep.mubr.bf16.mxu0 0
        %508 = vmatmul.mubr.bf16.gmra.mrb[0].mxu0 %v381
        %v509 = vpop.f32.mrb[0].mxu0
        %v510 = vadd.f32 0.0, %v509
        %v511 = vpop.f32.mrb[0].mxu0
        %v512 = vpop.f32.mrb[0].mxu0
        %v513 = vadd.f32 0.0, %v512
        %v514 = vpop.f32.mrb[0].mxu0
        %515 = vmatprep.mubr.bf16.mxu0 0
        %516 = vmatmul.mubr.bf16.gmra.mrb[0].mxu0 %v382
        %v517 = vpop.f32.mrb[0].mxu0
        %v518 = vadd.f32 0.0, %v517
        %v519 = vpop.f32.mrb[0].mxu0
        %v520 = vpop.f32.mrb[0].mxu0
        %v521 = vadd.f32 0.0, %v520
        %v522 = vpop.f32.mrb[0].mxu0
        %523 = vmatprep.mubr.bf16.mxu0 0
        %524 = vmatmul.mubr.bf16.gmra.mrb[0].mxu0 %v383
        %v525 = vpop.f32.mrb[0].mxu0
        %v526 = vadd.f32 0.0, %v525
        %v527 = vpop.f32.mrb[0].mxu0
        %v528 = vpop.f32.mrb[0].mxu0
        %v529 = vadd.f32 0.0, %v528
        %v530 = vpop.f32.mrb[0].mxu0
        %531 = vmatprep.mubr.bf16.mxu0 0
        %532 = vmatmul.mubr.bf16.gmra.mrb[0].mxu0 %v384
        %v533 = vpop.f32.mrb[0].mxu0
        %v534 = vadd.f32 0.0, %v533
        %v535 = vpop.f32.mrb[0].mxu0
        %v536 = vpop.f32.mrb[0].mxu0
        %v537 = vadd.f32 0.0, %v536
        %v538 = vpop.f32.mrb[0].mxu0
        %539 = vmatprep.mubr.bf16.mxu0 0
        %540 = vmatmul.mubr.bf16.gmra.mrb[0].mxu0 %v385
        %v541 = vpop.f32.mrb[0].mxu0
        %v542 = vadd.f32 0.0, %v541
        %v543 = vpop.f32.mrb[0].mxu0
        %v544 = vpop.f32.mrb[0].mxu0
        %v545 = vadd.f32 0.0, %v544
        %v546 = vpop.f32.mrb[0].mxu0
        %547 = vmatprep.mubr.bf16.mxu0 0
        %548 = vmatmul.mubr.bf16.gmra.mrb[0].mxu0 %v386
        %v549 = vpop.f32.mrb[0].mxu0
        %v550 = vadd.f32 0.0, %v549
        %v551 = vpop.f32.mrb[0].mxu0
        %v552 = vpop.f32.mrb[0].mxu0
        %v553 = vadd.f32 0.0, %v552
        %v554 = vpop.f32.mrb[0].mxu0
        %555 = vmatprep.mubr.bf16.mxu0 0
        %556 = vmatmul.mubr.bf16.gmra.mrb[0].mxu0 %v387
        %v557 = vpop.f32.mrb[0].mxu0
        %v558 = vadd.f32 0.0, %v557
        %v559 = vpop.f32.mrb[0].mxu0
        %v560 = vpop.f32.mrb[0].mxu0
        %v561 = vadd.f32 0.0, %v560
        %v562 = vpop.f32.mrb[0].mxu0
        %563 = vmatprep.mubr.bf16.mxu0 0
        %564 = vmatmul.mubr.bf16.gmra.mrb[0].mxu0 %v388
        %v565 = vpop.f32.mrb[0].mxu0
        %v566 = vadd.f32 0.0, %v565
        %v567 = vpop.f32.mrb[0].mxu0
        %v568 = vpop.f32.mrb[0].mxu0
        %v569 = vadd.f32 0.0, %v568
        %v570 = vpop.f32.mrb[0].mxu0
        %571 = vmatprep.mubr.bf16.mxu0 0
        %572 = vmatmul.mubr.bf16.gmra.mrb[0].mxu0 %v389
        %v573 = vpop.f32.mrb[0].mxu0
        %v574 = vadd.f32 0.0, %v573
        %v575 = vpop.f32.mrb[0].mxu0
        %v576 = vpop.f32.mrb[0].mxu0
        %v577 = vadd.f32 0.0, %v576
        %v578 = vpop.f32.mrb[0].mxu0
        %579 = vmatprep.mubr.bf16.mxu0 0
        %580 = vmatmul.mubr.bf16.gmra.mrb[0].mxu0 %v390
        %v581 = vpop.f32.mrb[0].mxu0
        %v582 = vadd.f32 0.0, %v581
        %v583 = vpop.f32.mrb[0].mxu0
        %v584 = vpop.f32.mrb[0].mxu0
        %v585 = vadd.f32 0.0, %v584
        %v586 = vpop.f32.mrb[0].mxu0
        %587 = vmatprep.mubr.bf16.mxu0 0
        %588 = vmatmul.mubr.bf16.gmra.mrb[0].mxu0 %v391
        %v589 = vpop.f32.mrb[0].mxu0
        %v590 = vadd.f32 0.0, %v589
        %v591 = vpop.f32.mrb[0].mxu0
        %v592 = vpop.f32.mrb[0].mxu0
        %v593 = vadd.f32 0.0, %v592
        %v594 = vpop.f32.mrb[0].mxu0
        %595 = vmatprep.mubr.bf16.mxu0 0
        %596 = vmatmul.mubr.bf16.gmra.mrb[0].mxu0 %v392
        %v597 = vpop.f32.mrb[0].mxu0
        %v598 = vadd.f32 0.0, %v597
        %v599 = vpop.f32.mrb[0].mxu0
        %v600 = vpop.f32.mrb[0].mxu0
        %v601 = vadd.f32 0.0, %v600
        %v602 = vpop.f32.mrb[0].mxu0
        %603 = vmatprep.mubr.bf16.mxu0 0
        %604 = vmatmul.mubr.bf16.gmra.mrb[0].mxu0 %v393
        %v605 = vpop.f32.mrb[0].mxu0
        %v606 = vadd.f32 0.0, %v605
        %v607 = vpop.f32.mrb[0].mxu0
        %v608 = vpop.f32.mrb[0].mxu0
        %v609 = vadd.f32 0.0, %v608
        %v610 = vpop.f32.mrb[0].mxu0
        %611 = vmatprep.mubr.bf16.mxu0 0
        %612 = vmatmul.mubr.bf16.gmra.mrb[0].mxu0 %v394
        %v613 = vpop.f32.mrb[0].mxu0
        %v614 = vadd.f32 0.0, %v613
        %v615 = vpop.f32.mrb[0].mxu0
        %v616 = vpop.f32.mrb[0].mxu0
        %v617 = vadd.f32 0.0, %v616
        %v618 = vpop.f32.mrb[0].mxu0
        %619 = vdwg.mxu0
        %v620 = vadd.f32 %v251, %v494
        %v621 = vadd.f32 %v252, %v497
        %v622 = vadd.f32 %v253, %v502
        %v623 = vadd.f32 %v254, %v505
        %v624 = vadd.f32 %v255, %v510
        %v625 = vadd.f32 %v256, %v513
        %v626 = vadd.f32 %v257, %v518
        %v627 = vadd.f32 %v258, %v521
        %v628 = vadd.f32 %v259, %v526
        %v629 = vadd.f32 %v260, %v529
        %v630 = vadd.f32 %v261, %v534
        %v631 = vadd.f32 %v262, %v537
        %v632 = vadd.f32 %v263, %v542
        %v633 = vadd.f32 %v264, %v545
        %v634 = vadd.f32 %v265, %v550
        %v635 = vadd.f32 %v266, %v553
        %v636 = vadd.f32 %v267, %v558
        %v637 = vadd.f32 %v268, %v561
        %v638 = vadd.f32 %v269, %v566
        %v639 = vadd.f32 %v270, %v569
        %v640 = vadd.f32 %v271, %v574
        %v641 = vadd.f32 %v272, %v577
        %v642 = vadd.f32 %v273, %v582
        %v643 = vadd.f32 %v274, %v585
        %v644 = vadd.f32 %v275, %v590
        %v645 = vadd.f32 %v276, %v593
        %v646 = vadd.f32 %v277, %v598
        %v647 = vadd.f32 %v278, %v601
        %v648 = vadd.f32 %v279, %v606
        %v649 = vadd.f32 %v280, %v609
        %v650 = vadd.f32 %v281, %v614
        %v651 = vadd.f32 %v282, %v617
        %652 = vst [vmem:[#allocation2] sm:$0xff] %v620
        %653 = vst [vmem:[#allocation2 + $0x8] sm:$0xff] %v621
        %654 = vst [vmem:[#allocation2 + $0x10] sm:$0xff] %v622
        %655 = vst [vmem:[#allocation2 + $0x18] sm:$0xff] %v623
        %656 = vst [vmem:[#allocation2 + $0x20] sm:$0xff] %v624
        %657 = vst [vmem:[#allocation2 + $0x28] sm:$0xff] %v625
        %658 = vst [vmem:[#allocation2 + $0x30] sm:$0xff] %v626
        %659 = vst [vmem:[#allocation2 + $0x38] sm:$0xff] %v627
        %660 = vst [vmem:[#allocation2 + $0x40] sm:$0xff] %v628
        %661 = vst [vmem:[#allocation2 + $0x48] sm:$0xff] %v629
        %662 = vst [vmem:[#allocation2 + $0x50] sm:$0xff] %v630
        %663 = vst [vmem:[#allocation2 + $0x58] sm:$0xff] %v631
        %664 = vst [vmem:[#allocation2 + $0x60] sm:$0xff] %v632
        %665 = vst [vmem:[#allocation2 + $0x68] sm:$0xff] %v633
        %666 = vst [vmem:[#allocation2 + $0x70] sm:$0xff] %v634
        %667 = vst [vmem:[#allocation2 + $0x78] sm:$0xff] %v635
        %668 = vst [vmem:[#allocation2 + $0x80] sm:$0xff] %v636
        %669 = vst [vmem:[#allocation2 + $0x88] sm:$0xff] %v637
        %670 = vst [vmem:[#allocation2 + $0x90] sm:$0xff] %v638
        %671 = vst [vmem:[#allocation2 + $0x98] sm:$0xff] %v639
        %672 = vst [vmem:[#allocation2 + $0xa0] sm:$0xff] %v640
        %673 = vst [vmem:[#allocation2 + $0xa8] sm:$0xff] %v641
        %674 = vst [vmem:[#allocation2 + $0xb0] sm:$0xff] %v642
        %675 = vst [vmem:[#allocation2 + $0xb8] sm:$0xff] %v643
        %676 = vst [vmem:[#allocation2 + $0xc0] sm:$0xff] %v644
        %677 = vst [vmem:[#allocation2 + $0xc8] sm:$0xff] %v645
        %678 = vst [vmem:[#allocation2 + $0xd0] sm:$0xff] %v646
        %679 = vst [vmem:[#allocation2 + $0xd8] sm:$0xff] %v647
        %680 = vst [vmem:[#allocation2 + $0xe0] sm:$0xff] %v648
        %681 = vst [vmem:[#allocation2 + $0xe8] sm:$0xff] %v649
        %682 = vst [vmem:[#allocation2 + $0xf0] sm:$0xff] %v650
        %683 = vst [vmem:[#allocation2 + $0xf8] sm:$0xff] %v651
        // Predicated region
        $region41: #{tpu_custom_call.1} parent=27 // pred_check
          %p684 = pneg %p196
        $region42: #{tpu_custom_call.1} parent=27 // pred_check_branch
          %686 = sbr.rel (%p684) target = $region44
        $region43: #{tpu_custom_call.1} parent=27 // pred_region
          %v687 = vld [vmem:[#allocation2] sm:$0xff]
          %v688 = vld [vmem:[#allocation2 + $0x8] sm:$0xff]
          %v689 = vld [vmem:[#allocation2 + $0x10] sm:$0xff]
          %v690 = vld [vmem:[#allocation2 + $0x18] sm:$0xff]
          %v691 = vld [vmem:[#allocation2 + $0x20] sm:$0xff]
          %v692 = vld [vmem:[#allocation2 + $0x28] sm:$0xff]
          %v693 = vld [vmem:[#allocation2 + $0x30] sm:$0xff]
          %v694 = vld [vmem:[#allocation2 + $0x38] sm:$0xff]
          %v695 = vld [vmem:[#allocation2 + $0x40] sm:$0xff]
          %v696 = vld [vmem:[#allocation2 + $0x48] sm:$0xff]
          %v697 = vld [vmem:[#allocation2 + $0x50] sm:$0xff]
          %v698 = vld [vmem:[#allocation2 + $0x58] sm:$0xff]
          %v699 = vld [vmem:[#allocation2 + $0x60] sm:$0xff]
          %v700 = vld [vmem:[#allocation2 + $0x68] sm:$0xff]
          %v701 = vld [vmem:[#allocation2 + $0x70] sm:$0xff]
          %v702 = vld [vmem:[#allocation2 + $0x78] sm:$0xff]
          %v703 = vld [vmem:[#allocation2 + $0x80] sm:$0xff]
          %v704 = vld [vmem:[#allocation2 + $0x88] sm:$0xff]
          %v705 = vld [vmem:[#allocation2 + $0x90] sm:$0xff]
          %v706 = vld [vmem:[#allocation2 + $0x98] sm:$0xff]
          %v707 = vld [vmem:[#allocation2 + $0xa0] sm:$0xff]
          %v708 = vld [vmem:[#allocation2 + $0xa8] sm:$0xff]
          %v709 = vld [vmem:[#allocation2 + $0xb0] sm:$0xff]
          %v710 = vld [vmem:[#allocation2 + $0xb8] sm:$0xff]
          %v711 = vld [vmem:[#allocation2 + $0xc0] sm:$0xff]
          %v712 = vld [vmem:[#allocation2 + $0xc8] sm:$0xff]
          %v713 = vld [vmem:[#allocation2 + $0xd0] sm:$0xff]
          %v714 = vld [vmem:[#allocation2 + $0xd8] sm:$0xff]
          %v715 = vld [vmem:[#allocation2 + $0xe0] sm:$0xff]
          %v716 = vld [vmem:[#allocation2 + $0xe8] sm:$0xff]
          %v717 = vld [vmem:[#allocation2 + $0xf0] sm:$0xff]
          %v718 = vld [vmem:[#allocation2 + $0xf8] sm:$0xff]
          %v719 = vpack.c.bf16 %v688, %v687
          %v720 = vpack.c.bf16 %v690, %v689
          %v721 = vpack.c.bf16 %v692, %v691
          %v722 = vpack.c.bf16 %v694, %v693
          %v723 = vpack.c.bf16 %v696, %v695
          %v724 = vpack.c.bf16 %v698, %v697
          %v725 = vpack.c.bf16 %v700, %v699
          %v726 = vpack.c.bf16 %v702, %v701
          %v727 = vpack.c.bf16 %v704, %v703
          %v728 = vpack.c.bf16 %v706, %v705
          %v729 = vpack.c.bf16 %v708, %v707
          %v730 = vpack.c.bf16 %v710, %v709
          %v731 = vpack.c.bf16 %v712, %v711
          %v732 = vpack.c.bf16 %v714, %v713
          %v733 = vpack.c.bf16 %v716, %v715
          %v734 = vpack.c.bf16 %v718, %v717
          %v751 = vunpack.c.l.b16 %v719
          %v752 = vunpack.c.h.b16 %v719
          %v753 = vunpack.c.l.b16 %v720
          %v754 = vunpack.c.h.b16 %v720
          %v755 = vunpack.c.l.b16 %v721
          %v756 = vunpack.c.h.b16 %v721
          %v757 = vunpack.c.l.b16 %v722
          %v758 = vunpack.c.h.b16 %v722
          %v759 = vunpack.c.l.b16 %v723
          %v760 = vunpack.c.h.b16 %v723
          %v761 = vunpack.c.l.b16 %v724
          %v762 = vunpack.c.h.b16 %v724
          %v763 = vunpack.c.l.b16 %v725
          %v764 = vunpack.c.h.b16 %v725
          %v765 = vunpack.c.l.b16 %v726
          %v766 = vunpack.c.h.b16 %v726
          %v767 = vunpack.c.l.b16 %v727
          %v768 = vunpack.c.h.b16 %v727
          %v769 = vunpack.c.l.b16 %v728
          %v770 = vunpack.c.h.b16 %v728
          %v771 = vunpack.c.l.b16 %v729
          %v772 = vunpack.c.h.b16 %v729
          %v773 = vunpack.c.l.b16 %v730
          %v774 = vunpack.c.h.b16 %v730
          %v775 = vunpack.c.l.b16 %v731
          %v776 = vunpack.c.h.b16 %v731
          %v777 = vunpack.c.l.b16 %v732
          %v778 = vunpack.c.h.b16 %v732
          %v779 = vunpack.c.l.b16 %v733
          %v780 = vunpack.c.h.b16 %v733
          %v781 = vunpack.c.l.b16 %v734
          %v782 = vunpack.c.h.b16 %v734
          %v783 = vpack.c.b16 %v751, %v751
          %v784 = vpack.c.b16 %v752, %v752
          %v785 = vpack.c.b16 %v753, %v753
          %v786 = vpack.c.b16 %v754, %v754
          %v787 = vpack.c.b16 %v755, %v755
          %v788 = vpack.c.b16 %v756, %v756
          %v789 = vpack.c.b16 %v757, %v757
          %v790 = vpack.c.b16 %v758, %v758
          %v791 = vpack.c.b16 %v759, %v759
          %v792 = vpack.c.b16 %v760, %v760
          %v793 = vpack.c.b16 %v761, %v761
          %v794 = vpack.c.b16 %v762, %v762
          %v795 = vpack.c.b16 %v763, %v763
          %v796 = vpack.c.b16 %v764, %v764
          %v797 = vpack.c.b16 %v765, %v765
          %v798 = vpack.c.b16 %v766, %v766
          %v799 = vpack.c.b16 %v767, %v767
          %v800 = vpack.c.b16 %v768, %v768
          %v801 = vpack.c.b16 %v769, %v769
          %v802 = vpack.c.b16 %v770, %v770
          %v803 = vpack.c.b16 %v771, %v771
          %v804 = vpack.c.b16 %v772, %v772
          %v805 = vpack.c.b16 %v773, %v773
          %v806 = vpack.c.b16 %v774, %v774
          %v807 = vpack.c.b16 %v775, %v775
          %v808 = vpack.c.b16 %v776, %v776
          %v809 = vpack.c.b16 %v777, %v777
          %v810 = vpack.c.b16 %v778, %v778
          %v811 = vpack.c.b16 %v779, %v779
          %v812 = vpack.c.b16 %v780, %v780
          %v813 = vpack.c.b16 %v781, %v781
          %v814 = vpack.c.b16 %v782, %v782
          %847 = vst [vmem:[%s192] sm:$0xf] %v783
          %848 = vst [vmem:[%s192 + $0x4] sm:$0xf] %v784
          %849 = vst [vmem:[%s192 + $0x8] sm:$0xf] %v785
          %850 = vst [vmem:[%s192 + $0xc] sm:$0xf] %v786
          %851 = vst [vmem:[%s192 + $0x10] sm:$0xf] %v787
          %852 = vst [vmem:[%s192 + $0x14] sm:$0xf] %v788
          %853 = vst [vmem:[%s192 + $0x18] sm:$0xf] %v789
          %854 = vst [vmem:[%s192 + $0x1c] sm:$0xf] %v790
          %855 = vst [vmem:[%s192 + $0x20] sm:$0xf] %v791
          %856 = vst [vmem:[%s192 + $0x24] sm:$0xf] %v792
          %857 = vst [vmem:[%s192 + $0x28] sm:$0xf] %v793
          %858 = vst [vmem:[%s192 + $0x2c] sm:$0xf] %v794
          %859 = vst [vmem:[%s192 + $0x30] sm:$0xf] %v795
          %860 = vst [vmem:[%s192 + $0x34] sm:$0xf] %v796
          %861 = vst [vmem:[%s192 + $0x38] sm:$0xf] %v797
          %862 = vst [vmem:[%s192 + $0x3c] sm:$0xf] %v798
          %863 = vst [vmem:[%s192 + $0x40] sm:$0xf] %v799
          %864 = vst [vmem:[%s192 + $0x44] sm:$0xf] %v800
          %865 = vst [vmem:[%s192 + $0x48] sm:$0xf] %v801
          %866 = vst [vmem:[%s192 + $0x4c] sm:$0xf] %v802
          %867 = vst [vmem:[%s192 + $0x50] sm:$0xf] %v803
          %868 = vst [vmem:[%s192 + $0x54] sm:$0xf] %v804
          %869 = vst [vmem:[%s192 + $0x58] sm:$0xf] %v805
          %870 = vst [vmem:[%s192 + $0x5c] sm:$0xf] %v806
          %871 = vst [vmem:[%s192 + $0x60] sm:$0xf] %v807
          %872 = vst [vmem:[%s192 + $0x64] sm:$0xf] %v808
          %873 = vst [vmem:[%s192 + $0x68] sm:$0xf] %v809
          %874 = vst [vmem:[%s192 + $0x6c] sm:$0xf] %v810
          %875 = vst [vmem:[%s192 + $0x70] sm:$0xf] %v811
          %876 = vst [vmem:[%s192 + $0x74] sm:$0xf] %v812
          %877 = vst [vmem:[%s192 + $0x78] sm:$0xf] %v813
          %878 = vst [vmem:[%s192 + $0x7c] sm:$0xf] %v814
        $region44: #{tpu_custom_call.1} parent=27 // pred_fallthru
          _
        %s879 = sand.u32 %s105, 1
        %s880 = scalar_lea.sflag [#allocation5], %s879
        %s881 = sand.u32 %s105, 1
        %s882 = smul.addr %s881, 128
        %s883 = scalar_lea.vmem [#allocation8], %s882
        // Predicated region
        $region45: #{tpu_custom_call.1} parent=27 // pred_check
          %p884 = pneg %p115
        $region46: #{tpu_custom_call.1} parent=27 // pred_check_branch
          %886 = sbr.rel (%p884) target = $region48
        $region47: #{tpu_custom_call.1} parent=27 // pred_region
          %s887 = smul.u32 32, %s24
          %s889 = ssub.s32 2048, 2048
          %890 = vsyncadd %s880, %s889
          %s891 = sadd.s32 %s26, %s887
          %s892 = smul.addr %s25, 32
          %s893 = sadd.s32 %s891, %s892
          %s894 = smul.addr %s893, 64
          %s895 = scalar_lea.hbm %s2, %s894
          %s896 = sshll.u32 %s883, 4
          %s897 = int_to_ptr.vmem [resolvable:$true] %s896
          %902 = dma.vmem_to_hbm [thread:$0]  %s897, 2048, %s895, %s880, 64, 64, 4
        $region48: #{tpu_custom_call.1} parent=27 // pred_fallthru
          _
      $region28: #{tpu_custom_call.1} parent=5 // pred_fallthru
        _
      %p903 = scmp.le.s32.totalorder 2, %s13
      // Predicated region
      $region49: #{tpu_custom_call.1} parent=5 // pred_check
        %p904 = pneg %p903
      $region50: #{tpu_custom_call.1} parent=5 // pred_check_branch
        %906 = sbr.rel (%p904) target = $region52
      $region51: #{tpu_custom_call.1} parent=5 // pred_region
        %s907 = ssub.s32 %s13, 2
        // Predicated region
        $region53: #{tpu_custom_call.1} parent=51 // pred_check
          %p908 = pneg %p121
        $region54: #{tpu_custom_call.1} parent=51 // pred_check_branch
          %910 = sbr.rel (%p908) target = $region56
        $region55: #{tpu_custom_call.1} parent=51 // pred_region
          %s911 = sand.u32 %s106, 1
          %s912 = scalar_lea.sflag [#allocation5], %s911
          %s913 = sand.u32 %s106, 1
          %s914 = smul.addr %s913, 128
          %s915 = scalar_lea.vmem [#allocation8], %s914
          %916 = dma.done %s912, 2048
        $region56: #{tpu_custom_call.1} parent=51 // pred_fallthru
          _
      $region52: #{tpu_custom_call.1} parent=5 // pred_fallthru
        _
    $region6: #{tpu_custom_call.1} parent=1 // loop_footer
      %s17 = sadd.s32 1, %s13
    $region7: #{tpu_custom_call.1} parent=1 // loop_footer_branch
      %12 = sbr.rel target = $region3
    $region8: #{tpu_custom_call.1} parent=1 // loop_exit
      _
    %917 = vsyncpa [#allocation4], 1
    %s918 = scalar_lea.sflag [#allocation4], 1
    %919 = vsyncpa %s918, 1
    %920 = vsyncpa [#allocation7], 1
    %921 = vsyncpa [#allocation5], 1
    %s922 = scalar_lea.sflag [#allocation5], 1
    %923 = vsyncpa %s922, 1

</llo_original>
